<compile_context>
chip_gen: v5e
topology: v5e:2x2
jax: 0.10.0
libtpu: 0.0.40
codegen_flags: <defaults>
</compile_context>

<pallas_src>
from functools import partial

import jax
import jax.numpy as jnp
from jax.experimental import pallas as pl
from jax.experimental.pallas import tpu as pltpu

# Model hyper-parameters implied by the forward pass.
D_EMBEDDING = 11                         # input_size from view(B, 5, 11)
SEQ_LEN = 5
HIDDEN = 32
NUM_CLASSES = 4
IN_FEATURES = 6 + SEQ_LEN * D_EMBEDDING  # 61
OUT_PAD = 128                            # lane-dense padded output width

GATE_W = 8 * HIDDEN                      # 256: fused gate width, per gate [fwd|bwd]
STATE_W = 2 * HIDDEN                     # 64: fused [h_fwd | h_bwd] state width


def _round_up(x, m):
    return (x + m - 1) // m * m


def _pick_b_tile(b):
    """>=2 grid steps when possible (v7x megacore), cap tile at 512 rows."""
    if b <= 8:
        return 8
    half = _round_up((b + 1) // 2, 8)
    return min(512, half)


# --------------------------------------------------------------------------
# Kernel
# --------------------------------------------------------------------------
def bilstm_kernel(x_ref, w_in_ref, w_hh_ref, b_ref, wfc_ref, bfc_ref, out_ref):
    """Fused bidirectional LSTM (layer 0) + FC for one batch tile.

    x_ref   : (T, B_tile, D)  time-major input tile
    w_in_ref: (D, 8H)         dense input projection, per gate [fwd|bwd], g-cols x2
    w_hh_ref: (2H, 8H)        block-structured recurrent weights, g-cols x2
    b_ref   : (1, 8H)         folded b_ih + b_hh (f32), g-lanes x2
    wfc_ref : (2H, 128)       fc weight, lane-padded
    bfc_ref : (1, 128)        fc bias, lane-padded (f32)
    out_ref : (B_tile, 128)   lane-dense output slab
    """
    t_steps = x_ref.shape[0]
    bt = x_ref.shape[1]
    g = w_hh_ref.shape[1]        # 8H = 256 fused gate width
    gh = g // 4                  # 2H = 64 per-gate (fwd|bwd) width

    w_in = w_in_ref[...]
    w_hh = w_hh_ref[...]
    bias = b_ref[...]            # (1, 8H) f32

    # Lane masks (built once): fwd half of every gate block, and the g gate.
    lane = jax.lax.broadcasted_iota(jnp.int32, (bt, g), 1)
    fwd_mask = (lane % gh) < (gh // 2)
    g_mask = (lane >= 2 * gh) & (lane < 3 * gh)

    # Input projection for every step / both directions, off the recurrent
    # critical path: T independent (bt, D) x (D, 8H) matmuls.
    xw = [jnp.dot(x_ref[s], w_in, preferred_element_type=jnp.float32)
          for s in range(t_steps)]
    # Fused-step x contribution: fwd lanes from x_s, bwd lanes from x_{T-1-s}
    # (this is where the time reversal is folded in), biases added once.
    gx = [jnp.where(fwd_mask, xw[s], xw[t_steps - 1 - s]) + bias
          for s in range(t_steps)]

    def cell(gates, c):
        # One full-width sigmoid; g-gate columns were pre-scaled by 2, so
        # tanh(z) = 2*sigmoid(2z) - 1 is a cheap VPU fixup (no full-width tanh).
        act = jax.nn.sigmoid(gates)
        act = jnp.where(g_mask, 2.0 * act - 1.0, act)
        i_g = act[:, 0 * gh:1 * gh]
        f_g = act[:, 1 * gh:2 * gh]
        g_g = act[:, 2 * gh:3 * gh]
        o_g = act[:, 3 * gh:4 * gh]
        c_new = f_g * c + i_g * g_g
        h_new = o_g * jnp.tanh(c_new)
        return h_new, c_new

    # Step 0: h == 0, so the recurrent matmul is skipped entirely.
    h, c = cell(gx[0], jnp.zeros((bt, gh), jnp.float32))
    # Fused bidirectional recurrence: T-1 dependent (bt,2H)x(2H,8H) matmuls.
    for s in range(1, t_steps):
        gates = gx[s] + jnp.dot(h.astype(w_hh.dtype), w_hh,
                                preferred_element_type=jnp.float32)
        h, c = cell(gates, c)

    # h == cat(h_fwd, h_bwd); fused FC writes a lane-dense 128-wide slab.
    out = jnp.dot(h.astype(wfc_ref.dtype), wfc_ref[...],
                  preferred_element_type=jnp.float32) + bfc_ref[...]
    out_ref[...] = out.astype(out_ref.dtype)


# --------------------------------------------------------------------------
# Parameter preparation (wrapper-side layout plumbing, PyTorch -> fused)
# --------------------------------------------------------------------------
def _fuse_params(params):
    h = HIDDEN
    wih_f, whh_f = params["wih_f"], params["whh_f"]
    wih_b, whh_b = params["wih_b"], params["whh_b"]
    b_f = params["bih_f"] + params["bhh_f"]
    b_b = params["bih_b"] + params["bhh_b"]

    z_hh = jnp.zeros((h, h), jnp.float32)
    in_blocks, hh_blocks, b_blocks = [], [], []
    for k in range(4):                       # PyTorch gate order: i, f, g, o
        # Pre-scale the g gate by 2 so the kernel can use sigmoid-only
        # activations: tanh(z) = 2*sigmoid(2z) - 1.
        scale = 2.0 if k == 2 else 1.0
        wf_in = wih_f[k * h:(k + 1) * h].T * scale   # (D, H)
        wb_in = wih_b[k * h:(k + 1) * h].T * scale
        wf_hh = whh_f[k * h:(k + 1) * h].T * scale   # (H, H)
        wb_hh = whh_b[k * h:(k + 1) * h].T * scale
        in_blocks.append(jnp.concatenate([wf_in, wb_in], axis=1))      # (D, 2H)
        hh_blocks.append(jnp.block([[wf_hh, z_hh], [z_hh, wb_hh]]))    # (2H, 2H)
        b_blocks.append(jnp.concatenate([b_f[k * h:(k + 1) * h] * scale,
                                         b_b[k * h:(k + 1) * h] * scale]))

    w_in = jnp.concatenate(in_blocks, axis=1)            # (D, 8H)   = (11, 256)
    w_hh = jnp.concatenate(hh_blocks, axis=1)            # (2H, 8H)  = (64, 256)
    bias = jnp.concatenate(b_blocks).reshape(1, 8 * h)   # (1, 8H)

    # Lane-padded FC (128-wide output slab -> unmasked stores).
    wfc_pad = jnp.zeros((2 * h, OUT_PAD), jnp.float32).at[:, :NUM_CLASSES].set(
        params["wfc"].T)
    bfc_pad = jnp.zeros((1, OUT_PAD), jnp.float32).at[0, :NUM_CLASSES].set(
        params["bfc"])
    return w_in, w_hh, bias, wfc_pad, bfc_pad


def init_params(key, d_emb=D_EMBEDDING, hidden=HIDDEN, num_classes=NUM_CLASSES):
    """Deterministic PyTorch-style init (uniform(-1/sqrt(H), 1/sqrt(H)))."""
    ks = jax.random.split(key, 10)
    bound = 1.0 / jnp.sqrt(jnp.float32(hidden))

    def u(k, shape):
        return jax.random.uniform(k, shape, jnp.float32, -bound, bound)

    return {
        "wih_f": u(ks[0], (4 * hidden, d_emb)),
        "whh_f": u(ks[1], (4 * hidden, hidden)),
        "bih_f": u(ks[2], (4 * hidden,)),
        "bhh_f": u(ks[3], (4 * hidden,)),
        "wih_b": u(ks[4], (4 * hidden, d_emb)),
        "whh_b": u(ks[5], (4 * hidden, hidden)),
        "bih_b": u(ks[6], (4 * hidden,)),
        "bhh_b": u(ks[7], (4 * hidden,)),
        "wfc": u(ks[8], (num_classes, 2 * hidden)),
        "bfc": u(ks[9], (num_classes,)),
    }


# --------------------------------------------------------------------------
# Wrapper
# --------------------------------------------------------------------------
@partial(jax.jit, static_argnames=("compute_dtype",))
def bilstm_forward(x, params, compute_dtype=jnp.bfloat16):
    b = x.shape[0]
    t, d = SEQ_LEN, D_EMBEDDING

    # Glue matching x[:, 6:].view(B, 5, 11); time-major layout (T, B, D) so the
    # kernel can pair row blocks t and T-1-t (no duplicated/reversed x copy).
    xs = x[:, 6:].reshape(b, t, d)
    x_tm = jnp.transpose(xs, (1, 0, 2))                        # (T, B, D)

    b_tile = _pick_b_tile(b)
    b_pad = _round_up(b, b_tile)
    if b_pad != b:
        x_tm = jnp.pad(x_tm, ((0, 0), (0, b_pad - b), (0, 0)))
    x_tm = x_tm.astype(compute_dtype)

    w_in, w_hh, bias, wfc, bfc = _fuse_params(params)
    w_in = w_in.astype(compute_dtype)
    w_hh = w_hh.astype(compute_dtype)
    wfc = wfc.astype(compute_dtype)
    # biases stay f32: they are added to the f32 MXU accumulators.

    out_pad = pl.pallas_call(
        bilstm_kernel,
        out_shape=jax.ShapeDtypeStruct((b_pad, OUT_PAD), compute_dtype),
        grid=(b_pad // b_tile,),
        in_specs=[
            pl.BlockSpec((t, b_tile, d), lambda i: (0, i, 0)),    # x tile (time-major)
            pl.BlockSpec((d, GATE_W), lambda i: (0, 0)),          # W_in  (resident)
            pl.BlockSpec((STATE_W, GATE_W), lambda i: (0, 0)),    # W_hh  (resident)
            pl.BlockSpec((1, GATE_W), lambda i: (0, 0)),          # bias
            pl.BlockSpec((STATE_W, OUT_PAD), lambda i: (0, 0)),   # fc weight
            pl.BlockSpec((1, OUT_PAD), lambda i: (0, 0)),         # fc bias
        ],
        out_specs=pl.BlockSpec((b_tile, OUT_PAD), lambda i: (i, 0)),
        compiler_params=pltpu.CompilerParams(
            dimension_semantics=("parallel",),
            # Covers v5e's smaller (16 MiB) scoped-VMEM default at b_tile=512.
            vmem_limit_bytes=32 * 1024 * 1024),
    )(x_tm, w_in, w_hh, bias, wfc, bfc)

    return out_pad[:b, :NUM_CLASSES].astype(jnp.float32)


# --------------------------------------------------------------------------
# Pure-JAX reference (PyTorch-style formulation) for correctness checking
# --------------------------------------------------------------------------
def bilstm_reference(x, params):
    b = x.shape[0]
    xs = x[:, 6:].reshape(b, SEQ_LEN, D_EMBEDDING).astype(jnp.float32)
    h_dim = HIDDEN

    def run_dir(wih, whh, bih, bhh, reverse):
        h = jnp.zeros((b, h_dim), jnp.float32)
        c = jnp.zeros((b, h_dim), jnp.float32)
        ts = range(SEQ_LEN - 1, -1, -1) if reverse else range(SEQ_LEN)
        for step in ts:
            x_t = xs[:, step, :]
            gates = x_t @ wih.T + h @ whh.T + bih + bhh
            i = jax.nn.sigmoid(gates[:, 0 * h_dim:1 * h_dim])
            f = jax.nn.sigmoid(gates[:, 1 * h_dim:2 * h_dim])
            g = jnp.tanh(gates[:, 2 * h_dim:3 * h_dim])
            o = jax.nn.sigmoid(gates[:, 3 * h_dim:4 * h_dim])
            c = f * c + i * g
            h = o * jnp.tanh(c)
        return h

    h_f = run_dir(params["wih_f"], params["whh_f"],
                  params["bih_f"], params["bhh_f"], False)
    h_b = run_dir(params["wih_b"], params["whh_b"],
                  params["bih_b"], params["bhh_b"], True)
    bi_h = jnp.concatenate([h_f, h_b], axis=1)
    return bi_h @ params["wfc"].T + params["bfc"]


if __name__ == "__main__":
    key = jax.random.PRNGKey(0)
    k_x, k_p = jax.random.split(key)
    params = init_params(k_p)

    # Small-batch case (single 8-row tile).
    B = 2
    x = jax.random.normal(k_x, (B, IN_FEATURES), dtype=jnp.float32)   # (2, 61)
    ref = bilstm_reference(x, params)

    out_f32 = jax.block_until_ready(
        bilstm_forward(x, params, compute_dtype=jnp.float32))
    assert out_f32.shape == (B, NUM_CLASSES)
    assert jnp.allclose(out_f32, ref, atol=1e-4, rtol=1e-3), "f32 mismatch (B=2)"

    # bf16 operand path (halved DMA); bf16-appropriate tolerance.
    out_bf16 = jax.block_until_ready(
        bilstm_forward(x, params, compute_dtype=jnp.bfloat16))
    assert jnp.allclose(out_bf16, ref, atol=3e-2, rtol=3e-2), "bf16 mismatch (B=2)"

    # Multi-tile case exercising the batch grid / pipelining / megacore path.
    B2 = 384
    x2 = jax.random.normal(k_x, (B2, IN_FEATURES), dtype=jnp.float32)
    ref2 = bilstm_reference(x2, params)

    out2_f32 = jax.block_until_ready(
        bilstm_forward(x2, params, compute_dtype=jnp.float32))
    assert out2_f32.shape == (B2, NUM_CLASSES)
    assert jnp.allclose(out2_f32, ref2, atol=1e-4, rtol=1e-3), "f32 mismatch (B=384)"

    out2_bf16 = jax.block_until_ready(
        bilstm_forward(x2, params, compute_dtype=jnp.bfloat16))
    assert jnp.allclose(out2_bf16, ref2, atol=3e-2, rtol=3e-2), "bf16 mismatch (B=384)"

    print("KERNEL_OK")
</pallas_src>

<mosaic_0001>
module attributes {stable_mosaic.version = 11 : i64} {
  func.func @bilstm_kernel(%arg0: i32, %arg1: memref<5x8x11xf32, #tpu.memory_space<vmem>>, %arg2: memref<11x256xf32, #tpu.memory_space<vmem>>, %arg3: memref<64x256xf32, #tpu.memory_space<vmem>>, %arg4: memref<1x256xf32, #tpu.memory_space<vmem>>, %arg5: memref<64x128xf32, #tpu.memory_space<vmem>>, %arg6: memref<1x128xf32, #tpu.memory_space<vmem>>, %arg7: memref<8x128xf32, #tpu.memory_space<vmem>>) attributes {dimension_semantics = [#tpu.dimension_semantics<parallel>], iteration_bounds = array<i64: 1>, scalar_prefetch = 0 : i64, scratch_operands = 0 : i64, tpu.core_type = #tpu.core_type<tc>, window_params = [{transform_indices = @transform_0, window_bounds = array<i64: 5, 8, 11>}, {pipeline_mode = #tpu.pipeline_mode<synchronous>, transform_indices = @transform_1, window_bounds = array<i64: 11, 256>}, {pipeline_mode = #tpu.pipeline_mode<synchronous>, transform_indices = @transform_2, window_bounds = array<i64: 64, 256>}, {pipeline_mode = #tpu.pipeline_mode<synchronous>, transform_indices = @transform_3, window_bounds = array<i64: 1, 256>}, {pipeline_mode = #tpu.pipeline_mode<synchronous>, transform_indices = @transform_4, window_bounds = array<i64: 64, 128>}, {pipeline_mode = #tpu.pipeline_mode<synchronous>, transform_indices = @transform_5, window_bounds = array<i64: 1, 128>}, {transform_indices = @transform_6, window_bounds = array<i64: 8, 128>}]} {
    %c0 = arith.constant 0 : index
    %c0_0 = arith.constant 0 : index
    %0 = vector.load %arg2[%c0, %c0_0] : memref<11x256xf32, #tpu.memory_space<vmem>>, vector<11x256xf32>
    %c0_1 = arith.constant 0 : index
    %c0_2 = arith.constant 0 : index
    %1 = vector.load %arg3[%c0_1, %c0_2] : memref<64x256xf32, #tpu.memory_space<vmem>>, vector<64x256xf32>
    %c0_3 = arith.constant 0 : index
    %c0_4 = arith.constant 0 : index
    %2 = vector.load %arg4[%c0_3, %c0_4] : memref<1x256xf32, #tpu.memory_space<vmem>>, vector<1x256xf32>
    %3 = tpu.iota {dimensions = array<i32: 1>} : vector<8x256xi32>
    %c64_i32 = arith.constant 64 : i32
    %c0_i32 = arith.constant 0 : i32
    %4 = arith.cmpi eq, %c64_i32, %c0_i32 : i32
    %c1_i32 = arith.constant 1 : i32
    %5 = arith.select %4, %c1_i32, %c64_i32 : i32
    %6 = vector.broadcast %5 : i32 to vector<8x256xi32>
    %7 = arith.remsi %3, %6 : vector<8x256xi32>
    %c0_i32_5 = arith.constant 0 : i32
    %8 = vector.broadcast %c0_i32_5 : i32 to vector<8x256xi32>
    %9 = arith.cmpi ne, %7, %8 : vector<8x256xi32>
    %c0_i32_6 = arith.constant 0 : i32
    %10 = vector.broadcast %c0_i32_6 : i32 to vector<8x256xi32>
    %11 = arith.cmpi slt, %7, %10 : vector<8x256xi32>
    %c0_i32_7 = arith.constant 0 : i32
    %12 = arith.cmpi slt, %5, %c0_i32_7 : i32
    %13 = vector.broadcast %12 : i1 to vector<8x256xi1>
    %14 = vector.broadcast %13 : vector<8x256xi1> to vector<8x256xi1>
    %15 = arith.xori %11, %14 : vector<8x256xi1>
    %16 = arith.andi %15, %9 : vector<8x256xi1>
    %17 = vector.broadcast %5 : i32 to vector<8x256xi32>
    %18 = arith.addi %7, %17 : vector<8x256xi32>
    %19 = arith.select %16, %18, %7 : vector<8x256xi1>, vector<8x256xi32>
    %c32_i32 = arith.constant 32 : i32
    %20 = vector.broadcast %c32_i32 : i32 to vector<8x256xi32>
    %21 = arith.cmpi slt, %19, %20 : vector<8x256xi32>
    %c128_i32 = arith.constant 128 : i32
    %22 = vector.broadcast %c128_i32 : i32 to vector<8x256xi32>
    %23 = arith.cmpi sge, %3, %22 : vector<8x256xi32>
    %c192_i32 = arith.constant 192 : i32
    %24 = vector.broadcast %c192_i32 : i32 to vector<8x256xi32>
    %25 = arith.cmpi slt, %3, %24 : vector<8x256xi32>
    %26 = arith.andi %23, %25 : vector<8x256xi1>
    %c0_8 = arith.constant 0 : index
    %c0_9 = arith.constant 0 : index
    %c0_10 = arith.constant 0 : index
    %27 = vector.load %arg1[%c0_8, %c0_9, %c0_10] : memref<5x8x11xf32, #tpu.memory_space<vmem>>, vector<1x8x11xf32>
    %28 = vector.shape_cast %27 : vector<1x8x11xf32> to vector<8x11xf32>
    %cst = arith.constant dense<0.000000e+00> : vector<8x256xf32>
    %29 = tpu.matmul %28, %0, %cst {dimension_numbers = #tpu.dot_dimension_numbers<[1], [0], [0], [1], [0, 0, 1, 1], [], []>} : vector<8x11xf32>, vector<11x256xf32>, vector<8x256xf32> -> vector<8x256xf32>
    %c1 = arith.constant 1 : index
    %c0_11 = arith.constant 0 : index
    %c0_12 = arith.constant 0 : index
    %30 = vector.load %arg1[%c1, %c0_11, %c0_12] : memref<5x8x11xf32, #tpu.memory_space<vmem>>, vector<1x8x11xf32>
    %31 = vector.shape_cast %30 : vector<1x8x11xf32> to vector<8x11xf32>
    %cst_13 = arith.constant dense<0.000000e+00> : vector<8x256xf32>
    %32 = tpu.matmul %31, %0, %cst_13 {dimension_numbers = #tpu.dot_dimension_numbers<[1], [0], [0], [1], [0, 0, 1, 1], [], []>} : vector<8x11xf32>, vector<11x256xf32>, vector<8x256xf32> -> vector<8x256xf32>
    %c2 = arith.constant 2 : index
    %c0_14 = arith.constant 0 : index
    %c0_15 = arith.constant 0 : index
    %33 = vector.load %arg1[%c2, %c0_14, %c0_15] : memref<5x8x11xf32, #tpu.memory_space<vmem>>, vector<1x8x11xf32>
    %34 = vector.shape_cast %33 : vector<1x8x11xf32> to vector<8x11xf32>
    %cst_16 = arith.constant dense<0.000000e+00> : vector<8x256xf32>
    %35 = tpu.matmul %34, %0, %cst_16 {dimension_numbers = #tpu.dot_dimension_numbers<[1], [0], [0], [1], [0, 0, 1, 1], [], []>} : vector<8x11xf32>, vector<11x256xf32>, vector<8x256xf32> -> vector<8x256xf32>
    %c3 = arith.constant 3 : index
    %c0_17 = arith.constant 0 : index
    %c0_18 = arith.constant 0 : index
    %36 = vector.load %arg1[%c3, %c0_17, %c0_18] : memref<5x8x11xf32, #tpu.memory_space<vmem>>, vector<1x8x11xf32>
    %37 = vector.shape_cast %36 : vector<1x8x11xf32> to vector<8x11xf32>
    %cst_19 = arith.constant dense<0.000000e+00> : vector<8x256xf32>
    %38 = tpu.matmul %37, %0, %cst_19 {dimension_numbers = #tpu.dot_dimension_numbers<[1], [0], [0], [1], [0, 0, 1, 1], [], []>} : vector<8x11xf32>, vector<11x256xf32>, vector<8x256xf32> -> vector<8x256xf32>
    %c4 = arith.constant 4 : index
    %c0_20 = arith.constant 0 : index
    %c0_21 = arith.constant 0 : index
    %39 = vector.load %arg1[%c4, %c0_20, %c0_21] : memref<5x8x11xf32, #tpu.memory_space<vmem>>, vector<1x8x11xf32>
    %40 = vector.shape_cast %39 : vector<1x8x11xf32> to vector<8x11xf32>
    %cst_22 = arith.constant dense<0.000000e+00> : vector<8x256xf32>
    %41 = tpu.matmul %40, %0, %cst_22 {dimension_numbers = #tpu.dot_dimension_numbers<[1], [0], [0], [1], [0, 0, 1, 1], [], []>} : vector<8x11xf32>, vector<11x256xf32>, vector<8x256xf32> -> vector<8x256xf32>
    %42 = arith.select %21, %29, %41 : vector<8x256xi1>, vector<8x256xf32>
    %43 = vector.broadcast %2 : vector<1x256xf32> to vector<8x256xf32>
    %44 = arith.addf %42, %43 : vector<8x256xf32>
    %45 = arith.select %21, %32, %38 : vector<8x256xi1>, vector<8x256xf32>
    %46 = vector.broadcast %2 : vector<1x256xf32> to vector<8x256xf32>
    %47 = arith.addf %45, %46 : vector<8x256xf32>
    %48 = arith.select %21, %35, %35 : vector<8x256xi1>, vector<8x256xf32>
    %49 = vector.broadcast %2 : vector<1x256xf32> to vector<8x256xf32>
    %50 = arith.addf %48, %49 : vector<8x256xf32>
    %51 = arith.select %21, %38, %32 : vector<8x256xi1>, vector<8x256xf32>
    %52 = vector.broadcast %2 : vector<1x256xf32> to vector<8x256xf32>
    %53 = arith.addf %51, %52 : vector<8x256xf32>
    %54 = arith.select %21, %41, %29 : vector<8x256xi1>, vector<8x256xf32>
    %55 = vector.broadcast %2 : vector<1x256xf32> to vector<8x256xf32>
    %56 = arith.addf %54, %55 : vector<8x256xf32>
    %cst_23 = arith.constant 0.000000e+00 : f32
    %57 = vector.broadcast %cst_23 : f32 to vector<8x64xf32>
    %58 = arith.negf %44 : vector<8x256xf32>
    %59 = math.exp %58 : vector<8x256xf32>
    %cst_24 = arith.constant 1.000000e+00 : f32
    %60 = vector.broadcast %cst_24 : f32 to vector<8x256xf32>
    %61 = arith.addf %60, %59 : vector<8x256xf32>
    %62 = arith.divf %60, %61 : vector<8x256xf32>
    %cst_25 = arith.constant 2.000000e+00 : f32
    %63 = vector.broadcast %cst_25 : f32 to vector<8x256xf32>
    %64 = arith.mulf %63, %62 : vector<8x256xf32>
    %cst_26 = arith.constant 1.000000e+00 : f32
    %65 = vector.broadcast %cst_26 : f32 to vector<8x256xf32>
    %66 = arith.subf %64, %65 : vector<8x256xf32>
    %67 = arith.select %26, %66, %62 : vector<8x256xi1>, vector<8x256xf32>
    %68 = vector.extract_strided_slice %67 {offsets = [0, 0], sizes = [8, 64], strides = [1, 1]} : vector<8x256xf32> to vector<8x64xf32>
    %69 = vector.extract_strided_slice %67 {offsets = [0, 64], sizes = [8, 64], strides = [1, 1]} : vector<8x256xf32> to vector<8x64xf32>
    %70 = vector.extract_strided_slice %67 {offsets = [0, 128], sizes = [8, 64], strides = [1, 1]} : vector<8x256xf32> to vector<8x64xf32>
    %71 = vector.extract_strided_slice %67 {offsets = [0, 192], sizes = [8, 64], strides = [1, 1]} : vector<8x256xf32> to vector<8x64xf32>
    %72 = arith.mulf %69, %57 : vector<8x64xf32>
    %73 = arith.mulf %68, %70 : vector<8x64xf32>
    %74 = arith.addf %72, %73 : vector<8x64xf32>
    %75 = math.tanh %74 : vector<8x64xf32>
    %76 = arith.mulf %71, %75 : vector<8x64xf32>
    %cst_27 = arith.constant dense<0.000000e+00> : vector<8x256xf32>
    %77 = tpu.matmul %76, %1, %cst_27 {dimension_numbers = #tpu.dot_dimension_numbers<[1], [0], [0], [1], [0, 0, 1, 1], [], []>} : vector<8x64xf32>, vector<64x256xf32>, vector<8x256xf32> -> vector<8x256xf32>
    %78 = arith.addf %47, %77 : vector<8x256xf32>
    %79 = arith.negf %78 : vector<8x256xf32>
    %80 = math.exp %79 : vector<8x256xf32>
    %cst_28 = arith.constant 1.000000e+00 : f32
    %81 = vector.broadcast %cst_28 : f32 to vector<8x256xf32>
    %82 = arith.addf %81, %80 : vector<8x256xf32>
    %83 = arith.divf %81, %82 : vector<8x256xf32>
    %cst_29 = arith.constant 2.000000e+00 : f32
    %84 = vector.broadcast %cst_29 : f32 to vector<8x256xf32>
    %85 = arith.mulf %84, %83 : vector<8x256xf32>
    %cst_30 = arith.constant 1.000000e+00 : f32
    %86 = vector.broadcast %cst_30 : f32 to vector<8x256xf32>
    %87 = arith.subf %85, %86 : vector<8x256xf32>
    %88 = arith.select %26, %87, %83 : vector<8x256xi1>, vector<8x256xf32>
    %89 = vector.extract_strided_slice %88 {offsets = [0, 0], sizes = [8, 64], strides = [1, 1]} : vector<8x256xf32> to vector<8x64xf32>
    %90 = vector.extract_strided_slice %88 {offsets = [0, 64], sizes = [8, 64], strides = [1, 1]} : vector<8x256xf32> to vector<8x64xf32>
    %91 = vector.extract_strided_slice %88 {offsets = [0, 128], sizes = [8, 64], strides = [1, 1]} : vector<8x256xf32> to vector<8x64xf32>
    %92 = vector.extract_strided_slice %88 {offsets = [0, 192], sizes = [8, 64], strides = [1, 1]} : vector<8x256xf32> to vector<8x64xf32>
    %93 = arith.mulf %90, %74 : vector<8x64xf32>
    %94 = arith.mulf %89, %91 : vector<8x64xf32>
    %95 = arith.addf %93, %94 : vector<8x64xf32>
    %96 = math.tanh %95 : vector<8x64xf32>
    %97 = arith.mulf %92, %96 : vector<8x64xf32>
    %cst_31 = arith.constant dense<0.000000e+00> : vector<8x256xf32>
    %98 = tpu.matmul %97, %1, %cst_31 {dimension_numbers = #tpu.dot_dimension_numbers<[1], [0], [0], [1], [0, 0, 1, 1], [], []>} : vector<8x64xf32>, vector<64x256xf32>, vector<8x256xf32> -> vector<8x256xf32>
    %99 = arith.addf %50, %98 : vector<8x256xf32>
    %100 = arith.negf %99 : vector<8x256xf32>
    %101 = math.exp %100 : vector<8x256xf32>
    %cst_32 = arith.constant 1.000000e+00 : f32
    %102 = vector.broadcast %cst_32 : f32 to vector<8x256xf32>
    %103 = arith.addf %102, %101 : vector<8x256xf32>
    %104 = arith.divf %102, %103 : vector<8x256xf32>
    %cst_33 = arith.constant 2.000000e+00 : f32
    %105 = vector.broadcast %cst_33 : f32 to vector<8x256xf32>
    %106 = arith.mulf %105, %104 : vector<8x256xf32>
    %cst_34 = arith.constant 1.000000e+00 : f32
    %107 = vector.broadcast %cst_34 : f32 to vector<8x256xf32>
    %108 = arith.subf %106, %107 : vector<8x256xf32>
    %109 = arith.select %26, %108, %104 : vector<8x256xi1>, vector<8x256xf32>
    %110 = vector.extract_strided_slice %109 {offsets = [0, 0], sizes = [8, 64], strides = [1, 1]} : vector<8x256xf32> to vector<8x64xf32>
    %111 = vector.extract_strided_slice %109 {offsets = [0, 64], sizes = [8, 64], strides = [1, 1]} : vector<8x256xf32> to vector<8x64xf32>
    %112 = vector.extract_strided_slice %109 {offsets = [0, 128], sizes = [8, 64], strides = [1, 1]} : vector<8x256xf32> to vector<8x64xf32>
    %113 = vector.extract_strided_slice %109 {offsets = [0, 192], sizes = [8, 64], strides = [1, 1]} : vector<8x256xf32> to vector<8x64xf32>
    %114 = arith.mulf %111, %95 : vector<8x64xf32>
    %115 = arith.mulf %110, %112 : vector<8x64xf32>
    %116 = arith.addf %114, %115 : vector<8x64xf32>
    %117 = math.tanh %116 : vector<8x64xf32>
    %118 = arith.mulf %113, %117 : vector<8x64xf32>
    %cst_35 = arith.constant dense<0.000000e+00> : vector<8x256xf32>
    %119 = tpu.matmul %118, %1, %cst_35 {dimension_numbers = #tpu.dot_dimension_numbers<[1], [0], [0], [1], [0, 0, 1, 1], [], []>} : vector<8x64xf32>, vector<64x256xf32>, vector<8x256xf32> -> vector<8x256xf32>
    %120 = arith.addf %53, %119 : vector<8x256xf32>
    %121 = arith.negf %120 : vector<8x256xf32>
    %122 = math.exp %121 : vector<8x256xf32>
    %cst_36 = arith.constant 1.000000e+00 : f32
    %123 = vector.broadcast %cst_36 : f32 to vector<8x256xf32>
    %124 = arith.addf %123, %122 : vector<8x256xf32>
    %125 = arith.divf %123, %124 : vector<8x256xf32>
    %cst_37 = arith.constant 2.000000e+00 : f32
    %126 = vector.broadcast %cst_37 : f32 to vector<8x256xf32>
    %127 = arith.mulf %126, %125 : vector<8x256xf32>
    %cst_38 = arith.constant 1.000000e+00 : f32
    %128 = vector.broadcast %cst_38 : f32 to vector<8x256xf32>
    %129 = arith.subf %127, %128 : vector<8x256xf32>
    %130 = arith.select %26, %129, %125 : vector<8x256xi1>, vector<8x256xf32>
    %131 = vector.extract_strided_slice %130 {offsets = [0, 0], sizes = [8, 64], strides = [1, 1]} : vector<8x256xf32> to vector<8x64xf32>
    %132 = vector.extract_strided_slice %130 {offsets = [0, 64], sizes = [8, 64], strides = [1, 1]} : vector<8x256xf32> to vector<8x64xf32>
    %133 = vector.extract_strided_slice %130 {offsets = [0, 128], sizes = [8, 64], strides = [1, 1]} : vector<8x256xf32> to vector<8x64xf32>
    %134 = vector.extract_strided_slice %130 {offsets = [0, 192], sizes = [8, 64], strides = [1, 1]} : vector<8x256xf32> to vector<8x64xf32>
    %135 = arith.mulf %132, %116 : vector<8x64xf32>
    %136 = arith.mulf %131, %133 : vector<8x64xf32>
    %137 = arith.addf %135, %136 : vector<8x64xf32>
    %138 = math.tanh %137 : vector<8x64xf32>
    %139 = arith.mulf %134, %138 : vector<8x64xf32>
    %cst_39 = arith.constant dense<0.000000e+00> : vector<8x256xf32>
    %140 = tpu.matmul %139, %1, %cst_39 {dimension_numbers = #tpu.dot_dimension_numbers<[1], [0], [0], [1], [0, 0, 1, 1], [], []>} : vector<8x64xf32>, vector<64x256xf32>, vector<8x256xf32> -> vector<8x256xf32>
    %141 = arith.addf %56, %140 : vector<8x256xf32>
    %142 = arith.negf %141 : vector<8x256xf32>
    %143 = math.exp %142 : vector<8x256xf32>
    %cst_40 = arith.constant 1.000000e+00 : f32
    %144 = vector.broadcast %cst_40 : f32 to vector<8x256xf32>
    %145 = arith.addf %144, %143 : vector<8x256xf32>
    %146 = arith.divf %144, %145 : vector<8x256xf32>
    %cst_41 = arith.constant 2.000000e+00 : f32
    %147 = vector.broadcast %cst_41 : f32 to vector<8x256xf32>
    %148 = arith.mulf %147, %146 : vector<8x256xf32>
    %cst_42 = arith.constant 1.000000e+00 : f32
    %149 = vector.broadcast %cst_42 : f32 to vector<8x256xf32>
    %150 = arith.subf %148, %149 : vector<8x256xf32>
    %151 = arith.select %26, %150, %146 : vector<8x256xi1>, vector<8x256xf32>
    %152 = vector.extract_strided_slice %151 {offsets = [0, 0], sizes = [8, 64], strides = [1, 1]} : vector<8x256xf32> to vector<8x64xf32>
    %153 = vector.extract_strided_slice %151 {offsets = [0, 64], sizes = [8, 64], strides = [1, 1]} : vector<8x256xf32> to vector<8x64xf32>
    %154 = vector.extract_strided_slice %151 {offsets = [0, 128], sizes = [8, 64], strides = [1, 1]} : vector<8x256xf32> to vector<8x64xf32>
    %155 = vector.extract_strided_slice %151 {offsets = [0, 192], sizes = [8, 64], strides = [1, 1]} : vector<8x256xf32> to vector<8x64xf32>
    %156 = arith.mulf %153, %137 : vector<8x64xf32>
    %157 = arith.mulf %152, %154 : vector<8x64xf32>
    %158 = arith.addf %156, %157 : vector<8x64xf32>
    %159 = math.tanh %158 : vector<8x64xf32>
    %160 = arith.mulf %155, %159 : vector<8x64xf32>
    %c0_43 = arith.constant 0 : index
    %c0_44 = arith.constant 0 : index
    %161 = vector.load %arg5[%c0_43, %c0_44] : memref<64x128xf32, #tpu.memory_space<vmem>>, vector<64x128xf32>
    %cst_45 = arith.constant dense<0.000000e+00> : vector<8x128xf32>
    %162 = tpu.matmul %160, %161, %cst_45 {dimension_numbers = #tpu.dot_dimension_numbers<[1], [0], [0], [1], [0, 0, 1, 1], [], []>} : vector<8x64xf32>, vector<64x128xf32>, vector<8x128xf32> -> vector<8x128xf32>
    %c0_46 = arith.constant 0 : index
    %c0_47 = arith.constant 0 : index
    %163 = vector.load %arg6[%c0_46, %c0_47] : memref<1x128xf32, #tpu.memory_space<vmem>>, vector<1x128xf32>
    %164 = vector.broadcast %163 : vector<1x128xf32> to vector<8x128xf32>
    %165 = arith.addf %162, %164 : vector<8x128xf32>
    %c0_48 = arith.constant 0 : index
    %c0_49 = arith.constant 0 : index
    %166 = vector.load %arg7[%c0_48, %c0_49] : memref<8x128xf32, #tpu.memory_space<vmem>>, vector<8x128xf32>
    tpu.vector_store %arg7[%c0_48, %c0_49], %165 {strides = array<i32>} : memref<8x128xf32, #tpu.memory_space<vmem>>, vector<8x128xf32>,
    return
  }
  func.func @transform_0(%arg0: i32) -> (i32, i32, i32) {
    %c0_i32 = arith.constant 0 : i32
    %c0_i32_0 = arith.constant 0 : i32
    %c0_i32_1 = arith.constant 0 : i32
    return %c0_i32, %arg0, %c0_i32_0 : i32, i32, i32
  }
  func.func @transform_1(%arg0: i32) -> (i32, i32) {
    %c0_i32 = arith.constant 0 : i32
    %c0_i32_0 = arith.constant 0 : i32
    %c0_i32_1 = arith.constant 0 : i32
    return %c0_i32, %c0_i32_0 : i32, i32
  }
  func.func @transform_2(%arg0: i32) -> (i32, i32) {
    %c0_i32 = arith.constant 0 : i32
    %c0_i32_0 = arith.constant 0 : i32
    %c0_i32_1 = arith.constant 0 : i32
    return %c0_i32, %c0_i32_0 : i32, i32
  }
  func.func @transform_3(%arg0: i32) -> (i32, i32) {
    %c0_i32 = arith.constant 0 : i32
    %c0_i32_0 = arith.constant 0 : i32
    %c0_i32_1 = arith.constant 0 : i32
    return %c0_i32, %c0_i32_0 : i32, i32
  }
  func.func @transform_4(%arg0: i32) -> (i32, i32) {
    %c0_i32 = arith.constant 0 : i32
    %c0_i32_0 = arith.constant 0 : i32
    %c0_i32_1 = arith.constant 0 : i32
    return %c0_i32, %c0_i32_0 : i32, i32
  }
  func.func @transform_5(%arg0: i32) -> (i32, i32) {
    %c0_i32 = arith.constant 0 : i32
    %c0_i32_0 = arith.constant 0 : i32
    %c0_i32_1 = arith.constant 0 : i32
    return %c0_i32, %c0_i32_0 : i32, i32
  }
  func.func @transform_6(%arg0: i32) -> (i32, i32) {
    %c0_i32 = arith.constant 0 : i32
    %c0_i32_0 = arith.constant 0 : i32
    return %arg0, %c0_i32 : i32, i32
  }
}

</mosaic_0001>

<llo_original>
// kernel: bilstm_forward.1
$region0: #{bilstm_forward.1}
  #allocation0 [shape = 'u32[]', space=smem, size = 0x4, offset = 0x4, fixed_abs, tag = 'smem constant byte address 0x4 - core index']
  #allocation1 [shape = 'u32[72,128]{1,0:T(1,128)}', space=vmem, size = 0x9000, scoped, tag = 'internal scratch']
  %s0 = inlined_call_operand.vmem [shape: f32[5,8,11], index: 0, kind: input, shape index: {}]
  %s1 = inlined_call_operand.vmem [shape: f32[11,256], index: 1, kind: input, shape index: {}]
  %s2 = inlined_call_operand.vmem [shape: f32[64,256], index: 2, kind: input, shape index: {}]
  %s3 = inlined_call_operand.vmem [shape: f32[1,256], index: 3, kind: input, shape index: {}]
  %s4 = inlined_call_operand.vmem [shape: f32[64,128], index: 4, kind: input, shape index: {}]
  %s5 = inlined_call_operand.vmem [shape: f32[1,128], index: 5, kind: input, shape index: {}]
  %s6 = inlined_call_operand.vmem [shape: f32[8,128], index: 6, kind: output, shape index: {}]
  %s7 = sld [smem:[#allocation0]]
  $region34: #{bilstm_forward.1} parent=0
    _
  %s9 = ssub.s32 1, %s7
  %s10 = scalar_select 0, %s9, %s7
  // Predicated region
  $region2: #{bilstm_forward.1} parent=0 // pred_check
    _
  $region3: #{bilstm_forward.1} parent=0 // pred_check_branch
    %12 = sbr.rel (0) target = $region5
  $region4: #{bilstm_forward.1} parent=0 // pred_region
    _
  $region5: #{bilstm_forward.1} parent=0 // pred_fallthru
    _
  // Predicated region
  $region6: #{bilstm_forward.1} parent=0 // pred_check
    _
  $region7: #{bilstm_forward.1} parent=0 // pred_check_branch
    %14 = sbr.rel (0) target = $region9
  $region8: #{bilstm_forward.1} parent=0 // pred_region
    _
  $region9: #{bilstm_forward.1} parent=0 // pred_fallthru
    _
  // Predicated region
  $region10: #{bilstm_forward.1} parent=0 // pred_check
    _
  $region11: #{bilstm_forward.1} parent=0 // pred_check_branch
    %16 = sbr.rel (0) target = $region13
  $region12: #{bilstm_forward.1} parent=0 // pred_region
    _
  $region13: #{bilstm_forward.1} parent=0 // pred_fallthru
    _
  // Predicated region
  $region14: #{bilstm_forward.1} parent=0 // pred_check
    _
  $region15: #{bilstm_forward.1} parent=0 // pred_check_branch
    %18 = sbr.rel (0) target = $region17
  $region16: #{bilstm_forward.1} parent=0 // pred_region
    _
  $region17: #{bilstm_forward.1} parent=0 // pred_fallthru
    _
  // Predicated region
  $region18: #{bilstm_forward.1} parent=0 // pred_check
    _
  $region19: #{bilstm_forward.1} parent=0 // pred_check_branch
    %20 = sbr.rel (0) target = $region21
  $region20: #{bilstm_forward.1} parent=0 // pred_region
    _
  $region21: #{bilstm_forward.1} parent=0 // pred_fallthru
    _
  // Predicated region
  $region22: #{bilstm_forward.1} parent=0 // pred_check
    _
  $region23: #{bilstm_forward.1} parent=0 // pred_check_branch
    %22 = sbr.rel (0) target = $region25
  $region24: #{bilstm_forward.1} parent=0 // pred_region
    _
  $region25: #{bilstm_forward.1} parent=0 // pred_fallthru
    _
  %v23 = vld [vmem:[%s1] sm:$0xff]
  %v24 = vld [vmem:[%s1 + $0x8] sm:$0xff]
  %v25 = vld [vmem:[%s1 + $0x10] sm:$0x7]
  %v26 = vld [vmem:[%s1 + $0x18] sm:$0x7]
  %v27 = vld [vmem:[%s2] sm:$0xff]
  %v28 = vld [vmem:[%s2 + $0x8] sm:$0xff]
  %v29 = vld [vmem:[%s2 + $0x10] sm:$0xff]
  %v30 = vld [vmem:[%s2 + $0x18] sm:$0xff]
  %v31 = vld [vmem:[%s2 + $0x20] sm:$0xff]
  %v32 = vld [vmem:[%s2 + $0x28] sm:$0xff]
  %v33 = vld [vmem:[%s2 + $0x30] sm:$0xff]
  %v34 = vld [vmem:[%s2 + $0x38] sm:$0xff]
  %v35 = vld [vmem:[%s2 + $0x40] sm:$0xff]
  %v36 = vld [vmem:[%s2 + $0x48] sm:$0xff]
  %v37 = vld [vmem:[%s2 + $0x50] sm:$0xff]
  %v38 = vld [vmem:[%s2 + $0x58] sm:$0xff]
  %v39 = vld [vmem:[%s2 + $0x60] sm:$0xff]
  %v40 = vld [vmem:[%s2 + $0x68] sm:$0xff]
  %v41 = vld [vmem:[%s2 + $0x70] sm:$0xff]
  %v42 = vld [vmem:[%s2 + $0x78] sm:$0xff]
  %v43 = vld [vmem:[%s3] sm:$0x3]
  %v44 = vlaneseq
  %v45 = vand.u32 %v44, 127
  %v46 = vadd.s32 %v45, 128
  %vm47 = vcmp.lt.s32.totalorder %v45, 0
  %v48 = vsub.s32 0, %v45
  %v49 = vsel %vm47, %v48, %v45
  %v50 = vshrl.u32 %v49, 6
  %v51 = vand.u32 %v49, 63
  %v52 = vsub.s32 0, %v51
  %v53 = vsel %vm47, %v52, %v51
  %vm54 = vcmp.lt.s32.totalorder %v46, 0
  %v55 = vsub.s32 0, %v46
  %v56 = vsel %vm54, %v55, %v46
  %v57 = vshrl.u32 %v56, 6
  %v58 = vand.u32 %v56, 63
  %v59 = vsub.s32 0, %v58
  %v60 = vsel %vm54, %v59, %v58
  %vm61 = vcmp.ne.s32.totalorder %v53, 0
  %vm62 = vcmp.ne.s32.totalorder %v60, 0
  %vm63 = vcmp.lt.s32.totalorder %v53, 0
  %vm64 = vcmp.lt.s32.totalorder %v60, 0
  %vm65 = vmand %vm63, %vm61
  %vm66 = vmand %vm64, %vm62
  %v67 = vadd.s32 %v53, 64
  %v68 = vadd.s32 %v60, 64
  %v69 = vsel %vm65, %v67, %v53
  %v70 = vsel %vm66, %v68, %v60
  %vm71 = vcmp.lt.s32.totalorder %v69, 32
  %vm72 = vcmp.lt.s32.totalorder %v70, 32
  %vm73 = vcmp.ge.s32.totalorder %v45, 128
  %vm74 = vcmp.ge.s32.totalorder %v46, 128
  %vm75 = vcmp.lt.s32.totalorder %v45, 192
  %vm76 = vcmp.lt.s32.totalorder %v46, 192
  %vm77 = vmand %vm73, %vm75
  %vm78 = vmand %vm74, %vm76
  %v79 = vld [vmem:[%s0] sm:$0xff]
  %vm80 = vcmask 89088
  %v82 = vsel %vm80, %v79, 0
  %vm84 = vcmask 1042432
  %v86 = vsel %vm84, %v25, 0
  %v89 = vsel %vm84, %v26, 0
  %91 = vmatpush.msra.mxu0 0.0
  %92 = vmatpush.msra.mxu0 0.0
  %93 = vmatpush.msra.mxu0 0.0
  %94 = vmatpush.msra.mxu0 0.0
  %95 = vmatpush.msra.mxu0 0.0
  %96 = vmatpush.msra.mxu0 0.0
  %97 = vmatpush.msra.mxu0 0.0
  %98 = vmatpush.msra.mxu0 0.0
  %99 = vmatpush.msra.mxu0 0.0
  %100 = vmatpush.msra.mxu0 0.0
  %101 = vmatpush.msra.mxu0 0.0
  %102 = vmatpush.msra.mxu0 0.0
  %103 = vmatpush.msra.mxu0 0.0
  %104 = vmatpush.msra.mxu0 0.0
  %105 = vmatpush.msra.mxu0 %v86
  %106 = vmatpush.msra.mxu0 %v23
  %107 = vmatmul.f32.gmra.mxu0 %v82
  %v108 = vpop.f32.mrf.mxu0
  %v109 = vadd.f32 0.0, %v108
  %110 = vdwg.mxu0
  %111 = vmatpush.msra.mxu0 0.0
  %112 = vmatpush.msra.mxu0 0.0
  %113 = vmatpush.msra.mxu0 0.0
  %114 = vmatpush.msra.mxu0 0.0
  %115 = vmatpush.msra.mxu0 0.0
  %116 = vmatpush.msra.mxu0 0.0
  %117 = vmatpush.msra.mxu0 0.0
  %118 = vmatpush.msra.mxu0 0.0
  %119 = vmatpush.msra.mxu0 0.0
  %120 = vmatpush.msra.mxu0 0.0
  %121 = vmatpush.msra.mxu0 0.0
  %122 = vmatpush.msra.mxu0 0.0
  %123 = vmatpush.msra.mxu0 0.0
  %124 = vmatpush.msra.mxu0 0.0
  %125 = vmatpush.msra.mxu0 %v89
  %126 = vmatpush.msra.mxu0 %v24
  %127 = vmatmul.f32.gmra.mxu0 %v82
  %v128 = vpop.f32.mrf.mxu0
  %v129 = vadd.f32 0.0, %v128
  %130 = vdwg.mxu0
  %s131 = scalar_lea.vmem %s0, 8
  %v132 = vld [vmem:[%s131] sm:$0xff]
  %v134 = vsel %vm80, %v132, 0
  %136 = vmatpush.msra.mxu0 0.0
  %137 = vmatpush.msra.mxu0 0.0
  %138 = vmatpush.msra.mxu0 0.0
  %139 = vmatpush.msra.mxu0 0.0
  %140 = vmatpush.msra.mxu0 0.0
  %141 = vmatpush.msra.mxu0 0.0
  %142 = vmatpush.msra.mxu0 0.0
  %143 = vmatpush.msra.mxu0 0.0
  %144 = vmatpush.msra.mxu0 0.0
  %145 = vmatpush.msra.mxu0 0.0
  %146 = vmatpush.msra.mxu0 0.0
  %147 = vmatpush.msra.mxu0 0.0
  %148 = vmatpush.msra.mxu0 0.0
  %149 = vmatpush.msra.mxu0 0.0
  %150 = vmatpush.msra.mxu0 %v86
  %151 = vmatpush.msra.mxu0 %v23
  %152 = vmatmul.f32.gmra.mxu0 %v134
  %v153 = vpop.f32.mrf.mxu0
  %v154 = vadd.f32 0.0, %v153
  %155 = vdwg.mxu0
  %156 = vmatpush.msra.mxu0 0.0
  %157 = vmatpush.msra.mxu0 0.0
  %158 = vmatpush.msra.mxu0 0.0
  %159 = vmatpush.msra.mxu0 0.0
  %160 = vmatpush.msra.mxu0 0.0
  %161 = vmatpush.msra.mxu0 0.0
  %162 = vmatpush.msra.mxu0 0.0
  %163 = vmatpush.msra.mxu0 0.0
  %164 = vmatpush.msra.mxu0 0.0
  %165 = vmatpush.msra.mxu0 0.0
  %166 = vmatpush.msra.mxu0 0.0
  %167 = vmatpush.msra.mxu0 0.0
  %168 = vmatpush.msra.mxu0 0.0
  %169 = vmatpush.msra.mxu0 0.0
  %170 = vmatpush.msra.mxu0 %v89
  %171 = vmatpush.msra.mxu0 %v24
  %172 = vmatmul.f32.gmra.mxu0 %v134
  %v173 = vpop.f32.mrf.mxu0
  %v174 = vadd.f32 0.0, %v173
  %175 = vdwg.mxu0
  %s176 = scalar_lea.vmem %s0, 16
  %v177 = vld [vmem:[%s176] sm:$0xff]
  %s178 = scalar_lea.vmem %s0, 24
  %v179 = vld [vmem:[%s178] sm:$0xff]
  %v181 = vsel %vm80, %v179, 0
  %183 = vmatpush.msra.mxu0 0.0
  %184 = vmatpush.msra.mxu0 0.0
  %185 = vmatpush.msra.mxu0 0.0
  %186 = vmatpush.msra.mxu0 0.0
  %187 = vmatpush.msra.mxu0 0.0
  %188 = vmatpush.msra.mxu0 0.0
  %189 = vmatpush.msra.mxu0 0.0
  %190 = vmatpush.msra.mxu0 0.0
  %191 = vmatpush.msra.mxu0 0.0
  %192 = vmatpush.msra.mxu0 0.0
  %193 = vmatpush.msra.mxu0 0.0
  %194 = vmatpush.msra.mxu0 0.0
  %195 = vmatpush.msra.mxu0 0.0
  %196 = vmatpush.msra.mxu0 0.0
  %197 = vmatpush.msra.mxu0 %v86
  %198 = vmatpush.msra.mxu0 %v23
  %199 = vmatmul.f32.gmra.mxu0 %v181
  %v200 = vpop.f32.mrf.mxu0
  %v201 = vadd.f32 0.0, %v200
  %202 = vdwg.mxu0
  %203 = vmatpush.msra.mxu0 0.0
  %204 = vmatpush.msra.mxu0 0.0
  %205 = vmatpush.msra.mxu0 0.0
  %206 = vmatpush.msra.mxu0 0.0
  %207 = vmatpush.msra.mxu0 0.0
  %208 = vmatpush.msra.mxu0 0.0
  %209 = vmatpush.msra.mxu0 0.0
  %210 = vmatpush.msra.mxu0 0.0
  %211 = vmatpush.msra.mxu0 0.0
  %212 = vmatpush.msra.mxu0 0.0
  %213 = vmatpush.msra.mxu0 0.0
  %214 = vmatpush.msra.mxu0 0.0
  %215 = vmatpush.msra.mxu0 0.0
  %216 = vmatpush.msra.mxu0 0.0
  %217 = vmatpush.msra.mxu0 %v89
  %218 = vmatpush.msra.mxu0 %v24
  %219 = vmatmul.f32.gmra.mxu0 %v181
  %v220 = vpop.f32.mrf.mxu0
  %v221 = vadd.f32 0.0, %v220
  %222 = vdwg.mxu0
  %s223 = scalar_lea.vmem %s0, 32
  %v224 = vld [vmem:[%s223] sm:$0xff]
  %v226 = vsel %vm80, %v224, 0
  %228 = vmatpush.msra.mxu0 0.0
  %229 = vmatpush.msra.mxu0 0.0
  %230 = vmatpush.msra.mxu0 0.0
  %231 = vmatpush.msra.mxu0 0.0
  %232 = vmatpush.msra.mxu0 0.0
  %233 = vmatpush.msra.mxu0 0.0
  %234 = vmatpush.msra.mxu0 0.0
  %235 = vmatpush.msra.mxu0 0.0
  %236 = vmatpush.msra.mxu0 0.0
  %237 = vmatpush.msra.mxu0 0.0
  %238 = vmatpush.msra.mxu0 0.0
  %239 = vmatpush.msra.mxu0 0.0
  %240 = vmatpush.msra.mxu0 0.0
  %241 = vmatpush.msra.mxu0 0.0
  %242 = vmatpush.msra.mxu0 %v86
  %243 = vmatpush.msra.mxu0 %v23
  %244 = vmatmul.f32.gmra.mxu0 %v226
  %v245 = vpop.f32.mrf.mxu0
  %v246 = vadd.f32 0.0, %v245
  %247 = vdwg.mxu0
  %248 = vmatpush.msra.mxu0 0.0
  %249 = vmatpush.msra.mxu0 0.0
  %250 = vmatpush.msra.mxu0 0.0
  %251 = vmatpush.msra.mxu0 0.0
  %252 = vmatpush.msra.mxu0 0.0
  %253 = vmatpush.msra.mxu0 0.0
  %254 = vmatpush.msra.mxu0 0.0
  %255 = vmatpush.msra.mxu0 0.0
  %256 = vmatpush.msra.mxu0 0.0
  %257 = vmatpush.msra.mxu0 0.0
  %258 = vmatpush.msra.mxu0 0.0
  %259 = vmatpush.msra.mxu0 0.0
  %260 = vmatpush.msra.mxu0 0.0
  %261 = vmatpush.msra.mxu0 0.0
  %262 = vmatpush.msra.mxu0 %v89
  %263 = vmatpush.msra.mxu0 %v24
  %264 = vmatmul.f32.gmra.mxu0 %v226
  %v265 = vpop.f32.mrf.mxu0
  %v266 = vadd.f32 0.0, %v265
  %267 = vdwg.mxu0
  %v268 = vsel %vm71, %v109, %v246
  %v269 = vsel %vm72, %v129, %v266
  %v271 = vperm.slane %v43, 0
  %v272 = vperm.slane %v43, 1
  %v275 = vadd.f32 %v268, %v271
  %v276 = vadd.f32 %v269, %v272
  %v277 = vsel %vm71, %v154, %v201
  %v278 = vsel %vm72, %v174, %v221
  %v279 = vadd.f32 %v277, %v271
  %v280 = vadd.f32 %v278, %v272
  %v282 = vsel %vm80, %v177, 0
  %284 = vmatpush.msra.mxu0 0.0
  %285 = vmatpush.msra.mxu0 0.0
  %286 = vmatpush.msra.mxu0 0.0
  %287 = vmatpush.msra.mxu0 0.0
  %288 = vmatpush.msra.mxu0 0.0
  %289 = vmatpush.msra.mxu0 0.0
  %290 = vmatpush.msra.mxu0 0.0
  %291 = vmatpush.msra.mxu0 0.0
  %292 = vmatpush.msra.mxu0 0.0
  %293 = vmatpush.msra.mxu0 0.0
  %294 = vmatpush.msra.mxu0 0.0
  %295 = vmatpush.msra.mxu0 0.0
  %296 = vmatpush.msra.mxu0 0.0
  %297 = vmatpush.msra.mxu0 0.0
  %298 = vmatpush.msra.mxu0 %v86
  %299 = vmatpush.msra.mxu0 %v23
  %300 = vmatmul.f32.gmra.mxu0 %v282
  %v301 = vpop.f32.mrf.mxu0
  %v302 = vadd.f32 %v271, %v301
  %303 = vdwg.mxu0
  %304 = vmatpush.msra.mxu0 0.0
  %305 = vmatpush.msra.mxu0 0.0
  %306 = vmatpush.msra.mxu0 0.0
  %307 = vmatpush.msra.mxu0 0.0
  %308 = vmatpush.msra.mxu0 0.0
  %309 = vmatpush.msra.mxu0 0.0
  %310 = vmatpush.msra.mxu0 0.0
  %311 = vmatpush.msra.mxu0 0.0
  %312 = vmatpush.msra.mxu0 0.0
  %313 = vmatpush.msra.mxu0 0.0
  %314 = vmatpush.msra.mxu0 0.0
  %315 = vmatpush.msra.mxu0 0.0
  %316 = vmatpush.msra.mxu0 0.0
  %317 = vmatpush.msra.mxu0 0.0
  %318 = vmatpush.msra.mxu0 %v89
  %319 = vmatpush.msra.mxu0 %v24
  %320 = vmatmul.f32.gmra.mxu0 %v282
  %v321 = vpop.f32.mrf.mxu0
  %v322 = vadd.f32 %v272, %v321
  %323 = vdwg.mxu0
  %v324 = vsel %vm71, %v201, %v154
  %v325 = vsel %vm72, %v221, %v174
  %v326 = vadd.f32 %v324, %v271
  %v327 = vadd.f32 %v325, %v272
  %v328 = vsel %vm71, %v246, %v109
  %v329 = vsel %vm72, %v266, %v129
  %v330 = vadd.f32 %v328, %v271
  %v331 = vadd.f32 %v329, %v272
  %v332 = vxor.u32 %v275, 2147483648
  %v333 = vxor.u32 %v276, 2147483648
  %v334 = vmul.f32 %v332, 1.442695
  %v335 = vpow.pop %v334
  %v336 = vmul.f32 %v333, 1.442695
  %v337 = vpow.pop %v336
  %v338 = vadd.f32 %v335, 1.0
  %v339 = vadd.f32 %v337, 1.0
  %v340 = vrcp.pop %v338
  %v341 = vmul.f32 %v338, %v340
  %v342 = vsub.f32 1.0, %v341
  %v343 = vmul.f32 %v340, %v342
  %v344 = vadd.f32 %v340, %v343
  %vm345 = vweird.f32 %v338
  %vm346 = vweird.f32 %v340
  %vm347 = vmor %vm345, %vm346
  %v348 = vsel %vm347, %v340, %v344
  %v349 = vand.u32 2147483647, %v338
  %vm350 = vcmp.eq.f32.partialorder %v349, 8.507059e+37
  %v351 = vand.u32 %v338, 2147483648
  %v352 = vor.u32 1.1754944e-38, %v351
  %v353 = vsel %vm350, %v352, %v348
  %v354 = vmul.f32 1.0, %v353
  %v355 = vrcp.pop %v339
  %v356 = vmul.f32 %v339, %v355
  %v357 = vsub.f32 1.0, %v356
  %v358 = vmul.f32 %v355, %v357
  %v359 = vadd.f32 %v355, %v358
  %vm360 = vweird.f32 %v339
  %vm361 = vweird.f32 %v355
  %vm362 = vmor %vm360, %vm361
  %v363 = vsel %vm362, %v355, %v359
  %v364 = vand.u32 2147483647, %v339
  %vm365 = vcmp.eq.f32.partialorder %v364, 8.507059e+37
  %v366 = vand.u32 %v339, 2147483648
  %v367 = vor.u32 1.1754944e-38, %v366
  %v368 = vsel %vm365, %v367, %v363
  %v369 = vmul.f32 1.0, %v368
  %v370 = vmul.f32 %v354, 2.0
  %v371 = vmul.f32 %v369, 2.0
  %v372 = vsub.f32 %v370, 1.0
  %v373 = vsub.f32 %v371, 1.0
  %v374 = vsel %vm77, %v372, %v354
  %v375 = vsel %vm78, %v373, %v369
  %v376 = vmul.f32 %v374, 0.0
  %v377 = vmul.f32 %v374, %v375
  %379 = vrot.lane.b32.xlu0 %v377, 64
  %v380 = vpop.permute.xlu0 %379
  %v382 = vadd.f32 %v376, %v380
  %v383 = vtanh.pop %v382
  %v384 = vmul.f32 %v375, %v383
  %386 = vrot.lane.b32.xlu0 %v384, 64
  %v387 = vpop.permute.xlu0 %386
  %vm388 = vcmask 523264
  %v389 = vsel %vm388, %v387, 0
  %391 = vmatpush.msra.mxu0 0.0
  %392 = vmatpush.msra.mxu0 0.0
  %393 = vmatpush.msra.mxu0 0.0
  %394 = vmatpush.msra.mxu0 0.0
  %395 = vmatpush.msra.mxu0 0.0
  %396 = vmatpush.msra.mxu0 0.0
  %397 = vmatpush.msra.mxu0 0.0
  %398 = vmatpush.msra.mxu0 0.0
  %399 = vmatpush.msra.mxu0 %v41
  %400 = vmatpush.msra.mxu0 %v39
  %401 = vmatpush.msra.mxu0 %v37
  %402 = vmatpush.msra.mxu0 %v35
  %403 = vmatpush.msra.mxu0 %v33
  %404 = vmatpush.msra.mxu0 %v31
  %405 = vmatpush.msra.mxu0 %v29
  %406 = vmatpush.msra.mxu0 %v27
  %407 = vmatmul.f32.gmra.mxu0 %v389
  %v408 = vpop.f32.mrf.mxu0
  %v409 = vadd.f32 0.0, %v408
  %410 = vdwg.mxu0
  %411 = vmatpush.msra.mxu0 0.0
  %412 = vmatpush.msra.mxu0 0.0
  %413 = vmatpush.msra.mxu0 0.0
  %414 = vmatpush.msra.mxu0 0.0
  %415 = vmatpush.msra.mxu0 0.0
  %416 = vmatpush.msra.mxu0 0.0
  %417 = vmatpush.msra.mxu0 0.0
  %418 = vmatpush.msra.mxu0 0.0
  %419 = vmatpush.msra.mxu0 %v42
  %420 = vmatpush.msra.mxu0 %v40
  %421 = vmatpush.msra.mxu0 %v38
  %422 = vmatpush.msra.mxu0 %v36
  %423 = vmatpush.msra.mxu0 %v34
  %424 = vmatpush.msra.mxu0 %v32
  %425 = vmatpush.msra.mxu0 %v30
  %426 = vmatpush.msra.mxu0 %v28
  %427 = vmatmul.f32.gmra.mxu0 %v389
  %v428 = vpop.f32.mrf.mxu0
  %v429 = vadd.f32 0.0, %v428
  %430 = vdwg.mxu0
  %v431 = vadd.f32 %v279, %v409
  %v432 = vadd.f32 %v280, %v429
  %v433 = vxor.u32 %v431, 2147483648
  %v434 = vxor.u32 %v432, 2147483648
  %v435 = vmul.f32 %v433, 1.442695
  %v436 = vpow.pop %v435
  %v437 = vmul.f32 %v434, 1.442695
  %v438 = vpow.pop %v437
  %v439 = vadd.f32 %v436, 1.0
  %v440 = vadd.f32 %v438, 1.0
  %v441 = vrcp.pop %v439
  %v442 = vmul.f32 %v439, %v441
  %v443 = vsub.f32 1.0, %v442
  %v444 = vmul.f32 %v441, %v443
  %v445 = vadd.f32 %v441, %v444
  %vm446 = vweird.f32 %v439
  %vm447 = vweird.f32 %v441
  %vm448 = vmor %vm446, %vm447
  %v449 = vsel %vm448, %v441, %v445
  %v450 = vand.u32 2147483647, %v439
  %vm451 = vcmp.eq.f32.partialorder %v450, 8.507059e+37
  %v452 = vand.u32 %v439, 2147483648
  %v453 = vor.u32 1.1754944e-38, %v452
  %v454 = vsel %vm451, %v453, %v449
  %v455 = vmul.f32 1.0, %v454
  %v456 = vrcp.pop %v440
  %v457 = vmul.f32 %v440, %v456
  %v458 = vsub.f32 1.0, %v457
  %v459 = vmul.f32 %v456, %v458
  %v460 = vadd.f32 %v456, %v459
  %vm461 = vweird.f32 %v440
  %vm462 = vweird.f32 %v456
  %vm463 = vmor %vm461, %vm462
  %v464 = vsel %vm463, %v456, %v460
  %v465 = vand.u32 2147483647, %v440
  %vm466 = vcmp.eq.f32.partialorder %v465, 8.507059e+37
  %v467 = vand.u32 %v440, 2147483648
  %v468 = vor.u32 1.1754944e-38, %v467
  %v469 = vsel %vm466, %v468, %v464
  %v470 = vmul.f32 1.0, %v469
  %v471 = vmul.f32 %v455, 2.0
  %v472 = vmul.f32 %v470, 2.0
  %v473 = vsub.f32 %v471, 1.0
  %v474 = vsub.f32 %v472, 1.0
  %v475 = vsel %vm77, %v473, %v455
  %v476 = vsel %vm78, %v474, %v470
  %v477 = vmul.f32 %v475, %v382
  %v478 = vmul.f32 %v475, %v476
  %480 = vrot.lane.b32.xlu0 %v478, 64
  %v481 = vpop.permute.xlu0 %480
  %v483 = vadd.f32 %v477, %v481
  %v484 = vtanh.pop %v483
  %v485 = vmul.f32 %v476, %v484
  %487 = vrot.lane.b32.xlu0 %v485, 64
  %v488 = vpop.permute.xlu0 %487
  %v489 = vsel %vm388, %v488, 0
  %491 = vmatpush.msra.mxu0 0.0
  %492 = vmatpush.msra.mxu0 0.0
  %493 = vmatpush.msra.mxu0 0.0
  %494 = vmatpush.msra.mxu0 0.0
  %495 = vmatpush.msra.mxu0 0.0
  %496 = vmatpush.msra.mxu0 0.0
  %497 = vmatpush.msra.mxu0 0.0
  %498 = vmatpush.msra.mxu0 0.0
  %499 = vmatpush.msra.mxu0 %v41
  %500 = vmatpush.msra.mxu0 %v39
  %501 = vmatpush.msra.mxu0 %v37
  %502 = vmatpush.msra.mxu0 %v35
  %503 = vmatpush.msra.mxu0 %v33
  %504 = vmatpush.msra.mxu0 %v31
  %505 = vmatpush.msra.mxu0 %v29
  %506 = vmatpush.msra.mxu0 %v27
  %507 = vmatmul.f32.gmra.mxu0 %v489
  %v508 = vpop.f32.mrf.mxu0
  %v509 = vadd.f32 0.0, %v508
  %510 = vdwg.mxu0
  %511 = vmatpush.msra.mxu0 0.0
  %512 = vmatpush.msra.mxu0 0.0
  %513 = vmatpush.msra.mxu0 0.0
  %514 = vmatpush.msra.mxu0 0.0
  %515 = vmatpush.msra.mxu0 0.0
  %516 = vmatpush.msra.mxu0 0.0
  %517 = vmatpush.msra.mxu0 0.0
  %518 = vmatpush.msra.mxu0 0.0
  %519 = vmatpush.msra.mxu0 %v42
  %520 = vmatpush.msra.mxu0 %v40
  %521 = vmatpush.msra.mxu0 %v38
  %522 = vmatpush.msra.mxu0 %v36
  %523 = vmatpush.msra.mxu0 %v34
  %524 = vmatpush.msra.mxu0 %v32
  %525 = vmatpush.msra.mxu0 %v30
  %526 = vmatpush.msra.mxu0 %v28
  %527 = vmatmul.f32.gmra.mxu0 %v489
  %v528 = vpop.f32.mrf.mxu0
  %v529 = vadd.f32 0.0, %v528
  %530 = vdwg.mxu0
  %v531 = vadd.f32 %v302, %v509
  %v532 = vadd.f32 %v322, %v529
  %v533 = vxor.u32 %v531, 2147483648
  %v534 = vxor.u32 %v532, 2147483648
  %v535 = vmul.f32 %v533, 1.442695
  %v536 = vpow.pop %v535
  %v537 = vmul.f32 %v534, 1.442695
  %v538 = vpow.pop %v537
  %v539 = vadd.f32 %v536, 1.0
  %v540 = vadd.f32 %v538, 1.0
  %v541 = vrcp.pop %v539
  %v542 = vmul.f32 %v539, %v541
  %v543 = vsub.f32 1.0, %v542
  %v544 = vmul.f32 %v541, %v543
  %v545 = vadd.f32 %v541, %v544
  %vm546 = vweird.f32 %v539
  %vm547 = vweird.f32 %v541
  %vm548 = vmor %vm546, %vm547
  %v549 = vsel %vm548, %v541, %v545
  %v550 = vand.u32 2147483647, %v539
  %vm551 = vcmp.eq.f32.partialorder %v550, 8.507059e+37
  %v552 = vand.u32 %v539, 2147483648
  %v553 = vor.u32 1.1754944e-38, %v552
  %v554 = vsel %vm551, %v553, %v549
  %v555 = vmul.f32 1.0, %v554
  %v556 = vrcp.pop %v540
  %v557 = vmul.f32 %v540, %v556
  %v558 = vsub.f32 1.0, %v557
  %v559 = vmul.f32 %v556, %v558
  %v560 = vadd.f32 %v556, %v559
  %vm561 = vweird.f32 %v540
  %vm562 = vweird.f32 %v556
  %vm563 = vmor %vm561, %vm562
  %v564 = vsel %vm563, %v556, %v560
  %v565 = vand.u32 2147483647, %v540
  %vm566 = vcmp.eq.f32.partialorder %v565, 8.507059e+37
  %v567 = vand.u32 %v540, 2147483648
  %v568 = vor.u32 1.1754944e-38, %v567
  %v569 = vsel %vm566, %v568, %v564
  %v570 = vmul.f32 1.0, %v569
  %v571 = vmul.f32 %v555, 2.0
  %v572 = vmul.f32 %v570, 2.0
  %v573 = vsub.f32 %v571, 1.0
  %v574 = vsub.f32 %v572, 1.0
  %v575 = vsel %vm77, %v573, %v555
  %v576 = vsel %vm78, %v574, %v570
  %v577 = vmul.f32 %v575, %v483
  %v578 = vmul.f32 %v575, %v576
  %580 = vrot.lane.b32.xlu0 %v578, 64
  %v581 = vpop.permute.xlu0 %580
  %v583 = vadd.f32 %v577, %v581
  %v584 = vtanh.pop %v583
  %v585 = vmul.f32 %v576, %v584
  %587 = vrot.lane.b32.xlu0 %v585, 64
  %v588 = vpop.permute.xlu0 %587
  %v589 = vsel %vm388, %v588, 0
  %591 = vmatpush.msra.mxu0 0.0
  %592 = vmatpush.msra.mxu0 0.0
  %593 = vmatpush.msra.mxu0 0.0
  %594 = vmatpush.msra.mxu0 0.0
  %595 = vmatpush.msra.mxu0 0.0
  %596 = vmatpush.msra.mxu0 0.0
  %597 = vmatpush.msra.mxu0 0.0
  %598 = vmatpush.msra.mxu0 0.0
  %599 = vmatpush.msra.mxu0 %v41
  %600 = vmatpush.msra.mxu0 %v39
  %601 = vmatpush.msra.mxu0 %v37
  %602 = vmatpush.msra.mxu0 %v35
  %603 = vmatpush.msra.mxu0 %v33
  %604 = vmatpush.msra.mxu0 %v31
  %605 = vmatpush.msra.mxu0 %v29
  %606 = vmatpush.msra.mxu0 %v27
  %607 = vmatmul.f32.gmra.mxu0 %v589
  %v608 = vpop.f32.mrf.mxu0
  %v609 = vadd.f32 0.0, %v608
  %610 = vdwg.mxu0
  %611 = vmatpush.msra.mxu0 0.0
  %612 = vmatpush.msra.mxu0 0.0
  %613 = vmatpush.msra.mxu0 0.0
  %614 = vmatpush.msra.mxu0 0.0
  %615 = vmatpush.msra.mxu0 0.0
  %616 = vmatpush.msra.mxu0 0.0
  %617 = vmatpush.msra.mxu0 0.0
  %618 = vmatpush.msra.mxu0 0.0
  %619 = vmatpush.msra.mxu0 %v42
  %620 = vmatpush.msra.mxu0 %v40
  %621 = vmatpush.msra.mxu0 %v38
  %622 = vmatpush.msra.mxu0 %v36
  %623 = vmatpush.msra.mxu0 %v34
  %624 = vmatpush.msra.mxu0 %v32
  %625 = vmatpush.msra.mxu0 %v30
  %626 = vmatpush.msra.mxu0 %v28
  %627 = vmatmul.f32.gmra.mxu0 %v589
  %v628 = vpop.f32.mrf.mxu0
  %v629 = vadd.f32 0.0, %v628
  %630 = vdwg.mxu0
  %v631 = vadd.f32 %v326, %v609
  %v632 = vadd.f32 %v327, %v629
  %v633 = vxor.u32 %v631, 2147483648
  %v634 = vxor.u32 %v632, 2147483648
  %v635 = vmul.f32 %v633, 1.442695
  %v636 = vpow.pop %v635
  %v637 = vmul.f32 %v634, 1.442695
  %v638 = vpow.pop %v637
  %v639 = vadd.f32 %v636, 1.0
  %v640 = vadd.f32 %v638, 1.0
  %v641 = vrcp.pop %v639
  %v642 = vmul.f32 %v639, %v641
  %v643 = vsub.f32 1.0, %v642
  %v644 = vmul.f32 %v641, %v643
  %v645 = vadd.f32 %v641, %v644
  %vm646 = vweird.f32 %v639
  %vm647 = vweird.f32 %v641
  %vm648 = vmor %vm646, %vm647
  %v649 = vsel %vm648, %v641, %v645
  %v650 = vand.u32 2147483647, %v639
  %vm651 = vcmp.eq.f32.partialorder %v650, 8.507059e+37
  %v652 = vand.u32 %v639, 2147483648
  %v653 = vor.u32 1.1754944e-38, %v652
  %v654 = vsel %vm651, %v653, %v649
  %v655 = vmul.f32 1.0, %v654
  %v656 = vrcp.pop %v640
  %v657 = vmul.f32 %v640, %v656
  %v658 = vsub.f32 1.0, %v657
  %v659 = vmul.f32 %v656, %v658
  %v660 = vadd.f32 %v656, %v659
  %vm661 = vweird.f32 %v640
  %vm662 = vweird.f32 %v656
  %vm663 = vmor %vm661, %vm662
  %v664 = vsel %vm663, %v656, %v660
  %v665 = vand.u32 2147483647, %v640
  %vm666 = vcmp.eq.f32.partialorder %v665, 8.507059e+37
  %v667 = vand.u32 %v640, 2147483648
  %v668 = vor.u32 1.1754944e-38, %v667
  %v669 = vsel %vm666, %v668, %v664
  %v670 = vmul.f32 1.0, %v669
  %v671 = vmul.f32 %v655, 2.0
  %v672 = vmul.f32 %v670, 2.0
  %v673 = vsub.f32 %v671, 1.0
  %v674 = vsub.f32 %v672, 1.0
  %v675 = vsel %vm77, %v673, %v655
  %v676 = vsel %vm78, %v674, %v670
  %v677 = vmul.f32 %v675, %v583
  %v678 = vmul.f32 %v675, %v676
  %680 = vrot.lane.b32.xlu0 %v678, 64
  %v681 = vpop.permute.xlu0 %680
  %v683 = vadd.f32 %v677, %v681
  %v684 = vtanh.pop %v683
  %v685 = vmul.f32 %v676, %v684
  %687 = vrot.lane.b32.xlu0 %v685, 64
  %v688 = vpop.permute.xlu0 %687
  %v689 = vsel %vm388, %v688, 0
  %691 = vmatpush.msra.mxu0 0.0
  %692 = vmatpush.msra.mxu0 0.0
  %693 = vmatpush.msra.mxu0 0.0
  %694 = vmatpush.msra.mxu0 0.0
  %695 = vmatpush.msra.mxu0 0.0
  %696 = vmatpush.msra.mxu0 0.0
  %697 = vmatpush.msra.mxu0 0.0
  %698 = vmatpush.msra.mxu0 0.0
  %699 = vmatpush.msra.mxu0 %v41
  %700 = vmatpush.msra.mxu0 %v39
  %701 = vmatpush.msra.mxu0 %v37
  %702 = vmatpush.msra.mxu0 %v35
  %703 = vmatpush.msra.mxu0 %v33
  %704 = vmatpush.msra.mxu0 %v31
  %705 = vmatpush.msra.mxu0 %v29
  %706 = vmatpush.msra.mxu0 %v27
  %707 = vmatmul.f32.gmra.mxu0 %v689
  %v708 = vpop.f32.mrf.mxu0
  %v709 = vadd.f32 0.0, %v708
  %710 = vdwg.mxu0
  %711 = vmatpush.msra.mxu0 0.0
  %712 = vmatpush.msra.mxu0 0.0
  %713 = vmatpush.msra.mxu0 0.0
  %714 = vmatpush.msra.mxu0 0.0
  %715 = vmatpush.msra.mxu0 0.0
  %716 = vmatpush.msra.mxu0 0.0
  %717 = vmatpush.msra.mxu0 0.0
  %718 = vmatpush.msra.mxu0 0.0
  %719 = vmatpush.msra.mxu0 %v42
  %720 = vmatpush.msra.mxu0 %v40
  %721 = vmatpush.msra.mxu0 %v38
  %722 = vmatpush.msra.mxu0 %v36
  %723 = vmatpush.msra.mxu0 %v34
  %724 = vmatpush.msra.mxu0 %v32
  %725 = vmatpush.msra.mxu0 %v30
  %726 = vmatpush.msra.mxu0 %v28
  %727 = vmatmul.f32.gmra.mxu0 %v689
  %v728 = vpop.f32.mrf.mxu0
  %v729 = vadd.f32 0.0, %v728
  %730 = vdwg.mxu0
  %v731 = vadd.f32 %v330, %v709
  %v732 = vadd.f32 %v331, %v729
  %v733 = vxor.u32 %v731, 2147483648
  %v734 = vxor.u32 %v732, 2147483648
  %v735 = vmul.f32 %v733, 1.442695
  %v736 = vpow.pop %v735
  %v737 = vmul.f32 %v734, 1.442695
  %v738 = vpow.pop %v737
  %v739 = vadd.f32 %v736, 1.0
  %v740 = vadd.f32 %v738, 1.0
  %v741 = vrcp.pop %v739
  %v742 = vmul.f32 %v739, %v741
  %v743 = vsub.f32 1.0, %v742
  %v744 = vmul.f32 %v741, %v743
  %v745 = vadd.f32 %v741, %v744
  %vm746 = vweird.f32 %v739
  %vm747 = vweird.f32 %v741
  %vm748 = vmor %vm746, %vm747
  %v749 = vsel %vm748, %v741, %v745
  %v750 = vand.u32 2147483647, %v739
  %vm751 = vcmp.eq.f32.partialorder %v750, 8.507059e+37
  %v752 = vand.u32 %v739, 2147483648
  %v753 = vor.u32 1.1754944e-38, %v752
  %v754 = vsel %vm751, %v753, %v749
  %v755 = vmul.f32 1.0, %v754
  %v756 = vrcp.pop %v740
  %v757 = vmul.f32 %v740, %v756
  %v758 = vsub.f32 1.0, %v757
  %v759 = vmul.f32 %v756, %v758
  %v760 = vadd.f32 %v756, %v759
  %vm761 = vweird.f32 %v740
  %vm762 = vweird.f32 %v756
  %vm763 = vmor %vm761, %vm762
  %v764 = vsel %vm763, %v756, %v760
  %v765 = vand.u32 2147483647, %v740
  %vm766 = vcmp.eq.f32.partialorder %v765, 8.507059e+37
  %v767 = vand.u32 %v740, 2147483648
  %v768 = vor.u32 1.1754944e-38, %v767
  %v769 = vsel %vm766, %v768, %v764
  %v770 = vmul.f32 1.0, %v769
  %v771 = vmul.f32 %v755, 2.0
  %v772 = vmul.f32 %v770, 2.0
  %v773 = vsub.f32 %v771, 1.0
  %v774 = vsub.f32 %v772, 1.0
  %v775 = vsel %vm77, %v773, %v755
  %v776 = vsel %vm78, %v774, %v770
  %v777 = vmul.f32 %v775, %v683
  %v778 = vmul.f32 %v775, %v776
  %780 = vrot.lane.b32.xlu0 %v778, 64
  %v781 = vpop.permute.xlu0 %780
  %v783 = vadd.f32 %v777, %v781
  %v784 = vtanh.pop %v783
  %v785 = vmul.f32 %v776, %v784
  %v786 = vld [vmem:[%s4] sm:$0xff]
  %v787 = vld [vmem:[%s4 + $0x8] sm:$0xff]
  %v788 = vld [vmem:[%s4 + $0x10] sm:$0xff]
  %v789 = vld [vmem:[%s4 + $0x18] sm:$0xff]
  %v790 = vld [vmem:[%s4 + $0x20] sm:$0xff]
  %v791 = vld [vmem:[%s4 + $0x28] sm:$0xff]
  %v792 = vld [vmem:[%s4 + $0x30] sm:$0xff]
  %v793 = vld [vmem:[%s4 + $0x38] sm:$0xff]
  %v794 = vld [vmem:[%s5] sm:$0x1]
  %v796 = vperm.slane %v794, 0
  %799 = vrot.lane.b32.xlu0 %v785, 64
  %v800 = vpop.permute.xlu0 %799
  %v801 = vsel %vm388, %v800, 0
  %803 = vmatpush.msra.mxu0 0.0
  %804 = vmatpush.msra.mxu0 0.0
  %805 = vmatpush.msra.mxu0 0.0
  %806 = vmatpush.msra.mxu0 0.0
  %807 = vmatpush.msra.mxu0 0.0
  %808 = vmatpush.msra.mxu0 0.0
  %809 = vmatpush.msra.mxu0 0.0
  %810 = vmatpush.msra.mxu0 0.0
  %811 = vmatpush.msra.mxu0 %v793
  %812 = vmatpush.msra.mxu0 %v792
  %813 = vmatpush.msra.mxu0 %v791
  %814 = vmatpush.msra.mxu0 %v790
  %815 = vmatpush.msra.mxu0 %v789
  %816 = vmatpush.msra.mxu0 %v788
  %817 = vmatpush.msra.mxu0 %v787
  %818 = vmatpush.msra.mxu0 %v786
  %819 = vmatmul.f32.gmra.mxu0 %v801
  %v820 = vpop.f32.mrf.mxu0
  %v821 = vadd.f32 %v796, %v820
  %822 = vdwg.mxu0
  %823 = vst [vmem:[%s6] sm:$0xff] %v821
  // Predicated region
  $region26: #{bilstm_forward.1} parent=0 // pred_check
    _
  $region27: #{bilstm_forward.1} parent=0 // pred_check_branch
    %825 = sbr.rel (0) target = $region29
  $region28: #{bilstm_forward.1} parent=0 // pred_region
    _
  $region29: #{bilstm_forward.1} parent=0 // pred_fallthru
    _
  // Predicated region
  $region30: #{bilstm_forward.1} parent=0 // pred_check
    _
  $region31: #{bilstm_forward.1} parent=0 // pred_check_branch
    %827 = sbr.rel (0) target = $region33
  $region32: #{bilstm_forward.1} parent=0 // pred_region
    _
  $region33: #{bilstm_forward.1} parent=0 // pred_fallthru
    _

</llo_original>
